<compile_context>
chip_gen: v7x
topology: tpu7x:2x2x1
jax: 0.10.0
libtpu: 0.0.40
codegen_flags: <defaults>
</compile_context>

<pallas_src>
import jax
import jax.numpy as jnp
from jax.experimental import pallas as pl
from jax.experimental.pallas import tpu as pltpu


def _round_up(x: int, m: int) -> int:
    return (x + m - 1) // m * m


def _pick_tile(n: int, max_tile: int, align: int, min_tiles: int = 1):
    """Tile size (multiple of `align`, close to max_tile) and padded extent.

    Guarantees: tile % align == 0, padded % tile == 0, padded >= n, and the
    padding waste is minimized by balancing the tile count.
    """
    n_al = _round_up(max(n, 1), align)
    n_tiles = max(min_tiles, -(-n_al // max(max_tile, align)))  # ceil div
    tile = _round_up(-(-n_al // n_tiles), align)
    return tile, n_tiles * tile


def _gcn_kernel(g_ref, hw_ref, b_ref, o_ref):
    # g_ref : (tm, tk)      compute dtype -- the only big HBM stream
    # hw_ref: (tk, out_pad) compute dtype, hw = h @ W precomputed outside
    # b_ref : (1, out_pad)  float32, resident across the whole grid
    # o_ref : (tm, out_pad) float32 output block, resident across k (accumulator)
    k = pl.program_id(1)

    @pl.when(k == 0)
    def _init():
        o_ref[...] = jnp.zeros_like(o_ref)

    # Single MXU matmul per step, f32 accumulation directly into the resident
    # output block (no VMEM scratch, no per-step casts).
    o_ref[...] += jnp.dot(g_ref[...], hw_ref[...],
                          preferred_element_type=jnp.float32)

    @pl.when(k == pl.num_programs(1) - 1)
    def _finalize():
        # Bias + ReLU on the VPU, single lane-dense store.
        o_ref[...] = jnp.maximum(o_ref[...] + b_ref[...], 0.0)


def gcn_forward(g, h, w, b, *, tm=512, tk=2048, compute_dtype=jnp.bfloat16):
    """relu( g @ (h @ W) + b ).   g:(N,N)  h:(N,in)  w:(in,out)  b:(out,).

    tm/tk: row / reduction tile sizes over N.  The kernel is HBM-bandwidth
    bound on streaming g, so bigger is better on every generation -- including
    v7x (3.2 TB/s HBM, 2 TCs, 64 MiB VMEM/TC): the footprint of even
    1024x2048 tiles is far below any VMEM limit.  Tiles auto-shrink for small N.
    compute_dtype: dtype fed to the MXU (f32 accumulation).  bf16 by default
    (halves g's bytes); jnp.float32 for exact f32; None keeps input dtypes.
    """
    N, in_dim = h.shape
    out_dim = w.shape[1]
    out_dtype = h.dtype
    cdt = g.dtype if compute_dtype is None else compute_dtype

    # Hoisted projection: computed once (not once per row-tile).
    hw = jnp.dot(h, w, preferred_element_type=jnp.float32)

    # ---- tiling / padding geometry -----------------------------------------
    out_pad = _round_up(max(out_dim, 128), 128)   # lane-dense; do NOT pad to 256
    n8 = _round_up(N, 8)
    # Split the row axis in two when there is enough work so the "parallel"
    # axis feeds both TensorCores (megacore / v7x).
    tm, n_rows_pad = _pick_tile(N, tm, 8, min_tiles=2 if n8 > 256 else 1)
    tk, n_cols_pad = _pick_tile(N, tk, 128)
    grid_i = n_rows_pad // tm
    grid_k = n_cols_pad // tk

    g_c = g.astype(cdt)
    hw_c = hw.astype(cdt)
    if n_rows_pad != N or n_cols_pad != N:
        g_c = jnp.pad(g_c, ((0, n_rows_pad - N), (0, n_cols_pad - N)))
    if n_cols_pad != N or out_pad != out_dim:
        hw_c = jnp.pad(hw_c, ((0, n_cols_pad - N), (0, out_pad - out_dim)))
    b_p = jnp.pad(b.astype(jnp.float32), ((0, out_pad - out_dim),)).reshape(1, out_pad)

    g_item = jnp.dtype(g_c.dtype).itemsize
    hw_item = jnp.dtype(hw_c.dtype).itemsize

    # Triple-buffer the g stream when there are multiple reduction steps.
    g_bufs = 3 if grid_k >= 2 else 2
    if grid_k >= 2:
        g_spec = pl.BlockSpec((tm, tk), lambda i, k: (i, k),
                              pipeline_mode=pl.Buffered(3))
    else:
        g_spec = pl.BlockSpec((tm, tk), lambda i, k: (i, k))

    vmem_need = (g_bufs * tm * tk * g_item          # g multi-buffer
                 + 2 * tk * out_pad * hw_item       # hw double-buffer
                 + 2 * tm * out_pad * 4             # resident f32 output block
                 + 2 * out_pad * 4)                 # bias
    vmem_limit = int(min(56 << 20, max(32 << 20, (vmem_need * 5) // 4)))

    cost = pl.CostEstimate(
        flops=2 * n_rows_pad * n_cols_pad * out_pad,
        transcendentals=0,
        bytes_accessed=(g_item * n_rows_pad * n_cols_pad            # g once
                        + hw_item * grid_i * n_cols_pad * out_pad   # hw per row-tile
                        + 4 * out_pad
                        + 4 * n_rows_pad * out_pad),
    )

    out_p = pl.pallas_call(
        _gcn_kernel,
        out_shape=jax.ShapeDtypeStruct((n_rows_pad, out_pad), jnp.float32),
        grid_spec=pltpu.PrefetchScalarGridSpec(
            num_scalar_prefetch=0,
            grid=(grid_i, grid_k),
            in_specs=[
                g_spec,                                              # big HBM stream
                pl.BlockSpec((tk, out_pad), lambda i, k: (k, 0)),    # hw tiles
                pl.BlockSpec((1, out_pad), lambda i, k: (0, 0)),     # bias, resident
            ],
            out_specs=pl.BlockSpec((tm, out_pad), lambda i, k: (i, 0)),
        ),
        compiler_params=pltpu.CompilerParams(
            dimension_semantics=("parallel", "arbitrary"),
            vmem_limit_bytes=vmem_limit,
        ),
        cost_estimate=cost,
    )(g_c, hw_c, b_p)

    out = out_p[:N, :out_dim]
    return out if out_dtype == jnp.float32 else out.astype(out_dtype)


if __name__ == "__main__":
    key = jax.random.PRNGKey(0)
    k_g, k_h, k_w, k_b = jax.random.split(key, 4)

    # Small shapes consistent with the module: N nodes, in_dim -> out_dim.
    N, in_dim, out_dim = 8, 32, 16

    g_raw = jax.random.uniform(k_g, (N, N), dtype=jnp.float32)
    g = g_raw / jnp.sum(g_raw, axis=-1, keepdims=True)   # row-normalized adjacency
    h = jax.random.normal(k_h, (N, in_dim), dtype=jnp.float32)

    bound = 1.0 / jnp.sqrt(jnp.float32(in_dim))
    w = jax.random.uniform(k_w, (in_dim, out_dim), dtype=jnp.float32,
                           minval=-bound, maxval=bound)
    b = jax.random.uniform(k_b, (out_dim,), dtype=jnp.float32,
                           minval=-bound, maxval=bound)

    ref = jnp.maximum(jnp.dot(jnp.dot(g, h), w) + b, 0.0)

    # Exact-ish f32 path.
    out_f32 = gcn_forward(g, h, w, b, compute_dtype=jnp.float32)
    jax.block_until_ready(out_f32)
    assert out_f32.shape == (N, out_dim)
    assert jnp.allclose(out_f32, ref, atol=1e-4, rtol=1e-4)

    # Default path: bf16 g stream, f32 accumulation.
    out_bf16 = gcn_forward(g, h, w, b)
    jax.block_until_ready(out_bf16)
    assert out_bf16.shape == (N, out_dim)
    assert jnp.allclose(out_bf16, ref, atol=5e-2, rtol=5e-2)

    # Multi-tile path: exercises the k-accumulator, the Buffered(3) g stream
    # and the 2-way "parallel" row axis (grid = (3, 3) with tm=tk=128).
    N2 = 384
    k_g2, k_h2 = jax.random.split(jax.random.PRNGKey(1), 2)
    g2_raw = jax.random.uniform(k_g2, (N2, N2), dtype=jnp.float32)
    g2 = g2_raw / jnp.sum(g2_raw, axis=-1, keepdims=True)
    h2 = jax.random.normal(k_h2, (N2, in_dim), dtype=jnp.float32)
    ref2 = jnp.maximum(jnp.dot(jnp.dot(g2, h2), w) + b, 0.0)

    out2 = gcn_forward(g2, h2, w, b, tm=128, tk=128, compute_dtype=jnp.float32)
    jax.block_until_ready(out2)
    assert out2.shape == (N2, out_dim)
    assert jnp.allclose(out2, ref2, atol=2e-3, rtol=2e-3)

    print("KERNEL_OK")
</pallas_src>

<mosaic_0001>
module attributes {stable_mosaic.version = 11 : i64} {
  func.func @_gcn_kernel(%arg0: i32, %arg1: i32, %arg2: memref<8x128xf32, #tpu.memory_space<vmem>>, %arg3: memref<128x128xf32, #tpu.memory_space<vmem>>, %arg4: memref<1x128xf32, #tpu.memory_space<vmem>>, %arg5: memref<8x128xf32, #tpu.memory_space<vmem>>) attributes {dimension_semantics = [#tpu.dimension_semantics<parallel>, #tpu.dimension_semantics<arbitrary>], iteration_bounds = array<i64: 1, 1>, scalar_prefetch = 0 : i64, scratch_operands = 0 : i64, tpu.core_type = #tpu.core_type<tc>, window_params = [{transform_indices = @transform_0, window_bounds = array<i64: 8, 128>}, {transform_indices = @transform_1, window_bounds = array<i64: 128, 128>}, {pipeline_mode = #tpu.pipeline_mode<synchronous>, transform_indices = @transform_2, window_bounds = array<i64: 1, 128>}, {transform_indices = @transform_3, window_bounds = array<i64: 8, 128>}]} {
    %c0_i32 = arith.constant 0 : i32
    %0 = arith.cmpi eq, %arg1, %c0_i32 : i32
    %1 = arith.extui %0 : i1 to i32
    %c0_i32_0 = arith.constant 0 : i32
    %2 = arith.cmpi ne, %1, %c0_i32_0 : i32
    scf.if %2 {
      %cst_10 = arith.constant 0.000000e+00 : f32
      %12 = vector.broadcast %cst_10 : f32 to vector<8x128xf32>
      %c0_11 = arith.constant 0 : index
      %c0_12 = arith.constant 0 : index
      %13 = vector.load %arg5[%c0_11, %c0_12] : memref<8x128xf32, #tpu.memory_space<vmem>>, vector<8x128xf32>
      tpu.vector_store %arg5[%c0_11, %c0_12], %12 {strides = array<i32>} : memref<8x128xf32, #tpu.memory_space<vmem>>, vector<8x128xf32>,
    } else {
    }
    %c0 = arith.constant 0 : index
    %c0_1 = arith.constant 0 : index
    %3 = vector.load %arg5[%c0, %c0_1] : memref<8x128xf32, #tpu.memory_space<vmem>>, vector<8x128xf32>
    %c0_2 = arith.constant 0 : index
    %c0_3 = arith.constant 0 : index
    %4 = vector.load %arg2[%c0_2, %c0_3] : memref<8x128xf32, #tpu.memory_space<vmem>>, vector<8x128xf32>
    %c0_4 = arith.constant 0 : index
    %c0_5 = arith.constant 0 : index
    %5 = vector.load %arg3[%c0_4, %c0_5] : memref<128x128xf32, #tpu.memory_space<vmem>>, vector<128x128xf32>
    %cst = arith.constant dense<0.000000e+00> : vector<8x128xf32>
    %6 = tpu.matmul %4, %5, %cst {dimension_numbers = #tpu.dot_dimension_numbers<[1], [0], [0], [1], [0, 0, 1, 1], [], []>} : vector<8x128xf32>, vector<128x128xf32>, vector<8x128xf32> -> vector<8x128xf32>
    %7 = arith.addf %3, %6 : vector<8x128xf32>
    %c0_6 = arith.constant 0 : index
    %c0_7 = arith.constant 0 : index
    %8 = vector.load %arg5[%c0_6, %c0_7] : memref<8x128xf32, #tpu.memory_space<vmem>>, vector<8x128xf32>
    tpu.vector_store %arg5[%c0_6, %c0_7], %7 {strides = array<i32>} : memref<8x128xf32, #tpu.memory_space<vmem>>, vector<8x128xf32>,
    %c0_i32_8 = arith.constant 0 : i32
    %9 = arith.cmpi eq, %arg1, %c0_i32_8 : i32
    %10 = arith.extui %9 : i1 to i32
    %c0_i32_9 = arith.constant 0 : i32
    %11 = arith.cmpi ne, %10, %c0_i32_9 : i32
    scf.if %11 {
      %c0_10 = arith.constant 0 : index
      %c0_11 = arith.constant 0 : index
      %12 = vector.load %arg5[%c0_10, %c0_11] : memref<8x128xf32, #tpu.memory_space<vmem>>, vector<8x128xf32>
      %c0_12 = arith.constant 0 : index
      %c0_13 = arith.constant 0 : index
      %13 = vector.load %arg4[%c0_12, %c0_13] : memref<1x128xf32, #tpu.memory_space<vmem>>, vector<1x128xf32>
      %14 = vector.broadcast %13 : vector<1x128xf32> to vector<8x128xf32>
      %15 = arith.addf %12, %14 : vector<8x128xf32>
      %cst_14 = arith.constant 0.000000e+00 : f32
      %16 = vector.broadcast %cst_14 : f32 to vector<8x128xf32>
      %17 = arith.maximumf %15, %16 : vector<8x128xf32>
      %c0_15 = arith.constant 0 : index
      %c0_16 = arith.constant 0 : index
      %18 = vector.load %arg5[%c0_15, %c0_16] : memref<8x128xf32, #tpu.memory_space<vmem>>, vector<8x128xf32>
      tpu.vector_store %arg5[%c0_15, %c0_16], %17 {strides = array<i32>} : memref<8x128xf32, #tpu.memory_space<vmem>>, vector<8x128xf32>,
    } else {
    }
    return
  }
  func.func @transform_0(%arg0: i32, %arg1: i32) -> (i32, i32) {
    %c0_i32 = arith.constant 0 : i32
    return %arg0, %arg1 : i32, i32
  }
  func.func @transform_1(%arg0: i32, %arg1: i32) -> (i32, i32) {
    %c0_i32 = arith.constant 0 : i32
    %c0_i32_0 = arith.constant 0 : i32
    return %arg1, %c0_i32 : i32, i32
  }
  func.func @transform_2(%arg0: i32, %arg1: i32) -> (i32, i32) {
    %c0_i32 = arith.constant 0 : i32
    %c0_i32_0 = arith.constant 0 : i32
    %c0_i32_1 = arith.constant 0 : i32
    return %c0_i32, %c0_i32_0 : i32, i32
  }
  func.func @transform_3(%arg0: i32, %arg1: i32) -> (i32, i32) {
    %c0_i32 = arith.constant 0 : i32
    %c0_i32_0 = arith.constant 0 : i32
    return %arg0, %c0_i32 : i32, i32
  }
}

</mosaic_0001>

<llo_original>
// kernel: tpu_custom_call.1
$region0: #{tpu_custom_call.1}
  #allocation0 [shape = 'u32[]', space=smem, size = 0x4, offset = 0x4, fixed_abs, tag = 'smem constant byte address 0x4 - core index']
  #allocation1 [shape = 'u32[144,128]{1,0:T(1,128)}', space=vmem, size = 0x12000, scoped, tag = 'internal scratch']
  %s0 = inlined_call_operand.hbm [shape: f32[8,128], index: 0, kind: input, shape index: {}]
  %s1 = inlined_call_operand.hbm [shape: f32[128,128], index: 1, kind: input, shape index: {}]
  %s2 = inlined_call_operand.vmem [shape: f32[1,128], index: 2, kind: input, shape index: {}]
  %s3 = inlined_call_operand.hbm [shape: f32[8,128], index: 3, kind: output, shape index: {}]
  %s4 = sld [smem:[#allocation0]]
  $region38: #{tpu_custom_call.1} parent=0
    _
  %s6 = ssub.s32 1, %s4
  %s7 = scalar_select 0, %s6, %s4
  $region1: #{tpu_custom_call.1} parent=0
    #allocation2 [shape = 'u8[4096]{0}', space=vmem, size = 0x1000, scoped, tag = 'input window, operand 0, single buffered']
    #allocation3 [shape = 's32[1]{0}', space=sflag, size = 0x4, scoped, tag = 'scoped memory for tpu_custom_call.1']
    #allocation4 [shape = 's32[1]{0}', space=sflag, size = 0x4, scoped, tag = 'scoped memory for tpu_custom_call.1']
    #allocation5 [shape = 'u8[65536]{0}', space=vmem, size = 0x10000, scoped, tag = 'input window, operand 1, single buffered']
    #allocation6 [shape = 's32[1]{0}', space=sflag, size = 0x4, scoped, tag = 'scoped memory for tpu_custom_call.1']
    #allocation7 [shape = 'u8[4096]{0}', space=vmem, size = 0x1000, scoped, tag = 'output window, operand 0, single buffered']
    %8 = vsyncpa [#allocation3], 0
    %9 = vsyncpa [#allocation6], 0
    %10 = vsyncpa [#allocation4], 0
    // Predicated region
    $region2: #{tpu_custom_call.1} parent=1 // pred_check
      _
    $region3: #{tpu_custom_call.1} parent=1 // pred_check_branch
      %12 = sbr.rel (0) target = $region5
    $region4: #{tpu_custom_call.1} parent=1 // pred_region
      %s14 = ssub.s32 128, 128
      %15 = vsyncadd [#allocation3], %s14
      %s17 = sshll.u32 [#allocation2], 4
      %s18 = int_to_ptr.vmem [resolvable:$true] %s17
      %20 = dma.hbm_to_vmem [thread:$0]  %s0, 128, %s18, [#allocation3]
    $region5: #{tpu_custom_call.1} parent=1 // pred_fallthru
      _
    // Predicated region
    $region6: #{tpu_custom_call.1} parent=1 // pred_check
      _
    $region7: #{tpu_custom_call.1} parent=1 // pred_check_branch
      %22 = sbr.rel (0) target = $region9
    $region8: #{tpu_custom_call.1} parent=1 // pred_region
      %s24 = ssub.s32 2048, 2048
      %25 = vsyncadd [#allocation6], %s24
      %s26 = sshll.u32 [#allocation5], 4
      %s27 = int_to_ptr.vmem [resolvable:$true] %s26
      %32 = dma.hbm_to_vmem [thread:$0]  %s1, 2048, %s27, [#allocation6], 128, 128, 8
    $region9: #{tpu_custom_call.1} parent=1 // pred_fallthru
      _
    // Predicated region
    $region10: #{tpu_custom_call.1} parent=1 // pred_check
      _
    $region11: #{tpu_custom_call.1} parent=1 // pred_check_branch
      %34 = sbr.rel (0) target = $region13
    $region12: #{tpu_custom_call.1} parent=1 // pred_region
      _
    $region13: #{tpu_custom_call.1} parent=1 // pred_fallthru
      _
    // Predicated region
    $region14: #{tpu_custom_call.1} parent=1 // pred_check
      _
    $region15: #{tpu_custom_call.1} parent=1 // pred_check_branch
      %36 = sbr.rel (0) target = $region17
    $region16: #{tpu_custom_call.1} parent=1 // pred_region
      %37 = dma.done [#allocation3], 128
    $region17: #{tpu_custom_call.1} parent=1 // pred_fallthru
      _
    // Predicated region
    $region18: #{tpu_custom_call.1} parent=1 // pred_check
      _
    $region19: #{tpu_custom_call.1} parent=1 // pred_check_branch
      %39 = sbr.rel (0) target = $region21
    $region20: #{tpu_custom_call.1} parent=1 // pred_region
      %40 = dma.done [#allocation6], 2048
    $region21: #{tpu_custom_call.1} parent=1 // pred_fallthru
      _
    %p41 = scmp.eq.s32.totalorder 0, 0
    // Predicated region
    $region22: #{tpu_custom_call.1} parent=1 // pred_check
      %p42 = pneg %p41
    $region23: #{tpu_custom_call.1} parent=1 // pred_check_branch
      %44 = sbr.rel (%p42) target = $region25
    $region24: #{tpu_custom_call.1} parent=1 // pred_region
      %45 = vst [vmem:[#allocation7] sm:$0xff] 0.0
    $region25: #{tpu_custom_call.1} parent=1 // pred_fallthru
      _
    %v46 = vld [vmem:[#allocation7] sm:$0xff]
    %v47 = vld [vmem:[#allocation2] sm:$0xff]
    %v48 = vld [vmem:[#allocation5] sm:$0xff]
    %v49 = vld [vmem:[#allocation5 + $0x8] sm:$0xff]
    %v50 = vld [vmem:[#allocation5 + $0x10] sm:$0xff]
    %v51 = vld [vmem:[#allocation5 + $0x18] sm:$0xff]
    %v52 = vld [vmem:[#allocation5 + $0x20] sm:$0xff]
    %v53 = vld [vmem:[#allocation5 + $0x28] sm:$0xff]
    %v54 = vld [vmem:[#allocation5 + $0x30] sm:$0xff]
    %v55 = vld [vmem:[#allocation5 + $0x38] sm:$0xff]
    %v56 = vld [vmem:[#allocation5 + $0x40] sm:$0xff]
    %v57 = vld [vmem:[#allocation5 + $0x48] sm:$0xff]
    %v58 = vld [vmem:[#allocation5 + $0x50] sm:$0xff]
    %v59 = vld [vmem:[#allocation5 + $0x58] sm:$0xff]
    %v60 = vld [vmem:[#allocation5 + $0x60] sm:$0xff]
    %v61 = vld [vmem:[#allocation5 + $0x68] sm:$0xff]
    %v62 = vld [vmem:[#allocation5 + $0x70] sm:$0xff]
    %v63 = vld [vmem:[#allocation5 + $0x78] sm:$0xff]
    %64 = vmatprep.subr.mxu0 0.0
    %65 = vmatpush1.msra.mxu0 %v48
    %66 = vmatprep.subr.mxu0 0.0
    %67 = vmatpush1.msra.mxu0 %v49
    %68 = vmatprep.subr.mxu0 0.0
    %69 = vmatpush1.msra.mxu0 %v50
    %70 = vmatprep.subr.mxu0 0.0
    %71 = vmatpush1.msra.mxu0 %v51
    %72 = vmatprep.subr.mxu0 0.0
    %73 = vmatpush1.msra.mxu0 %v52
    %74 = vmatprep.subr.mxu0 0.0
    %75 = vmatpush1.msra.mxu0 %v53
    %76 = vmatprep.subr.mxu0 0.0
    %77 = vmatpush1.msra.mxu0 %v54
    %78 = vmatprep.subr.mxu0 0.0
    %79 = vmatpush1.msra.mxu0 %v55
    %80 = vmatprep.subr.mxu0 0.0
    %81 = vmatpush1.msra.mxu0 %v56
    %82 = vmatprep.subr.mxu0 0.0
    %83 = vmatpush1.msra.mxu0 %v57
    %84 = vmatprep.subr.mxu0 0.0
    %85 = vmatpush1.msra.mxu0 %v58
    %86 = vmatprep.subr.mxu0 0.0
    %87 = vmatpush1.msra.mxu0 %v59
    %88 = vmatprep.subr.mxu0 0.0
    %89 = vmatpush1.msra.mxu0 %v60
    %90 = vmatprep.subr.mxu0 0.0
    %91 = vmatpush1.msra.mxu0 %v61
    %92 = vmatprep.subr.mxu0 0.0
    %93 = vmatpush1.msra.mxu0 %v62
    %94 = vmatprep.subr.mxu0 0.0
    %95 = vmatpush1.msra.mxu0 %v63
    %96 = vmatprep.subr.mxu0 0.0
    %97 = vmatpush1.msra.mxu0 0.0
    %98 = vmatprep.subr.mxu0 0.0
    %99 = vmatpush1.msra.mxu0 0.0
    %100 = vmatprep.subr.mxu0 0.0
    %101 = vmatpush1.msra.mxu0 0.0
    %102 = vmatprep.subr.mxu0 0.0
    %103 = vmatpush1.msra.mxu0 0.0
    %104 = vmatprep.subr.mxu0 0.0
    %105 = vmatpush1.msra.mxu0 0.0
    %106 = vmatprep.subr.mxu0 0.0
    %107 = vmatpush1.msra.mxu0 0.0
    %108 = vmatprep.subr.mxu0 0.0
    %109 = vmatpush1.msra.mxu0 0.0
    %110 = vmatprep.subr.mxu0 0.0
    %111 = vmatpush1.msra.mxu0 0.0
    %112 = vmatprep.subr.mxu0 0.0
    %113 = vmatpush1.msra.mxu0 0.0
    %114 = vmatprep.subr.mxu0 0.0
    %115 = vmatpush1.msra.mxu0 0.0
    %116 = vmatprep.subr.mxu0 0.0
    %117 = vmatpush1.msra.mxu0 0.0
    %118 = vmatprep.subr.mxu0 0.0
    %119 = vmatpush1.msra.mxu0 0.0
    %120 = vmatprep.subr.mxu0 0.0
    %121 = vmatpush1.msra.mxu0 0.0
    %122 = vmatprep.subr.mxu0 0.0
    %123 = vmatpush1.msra.mxu0 0.0
    %124 = vmatprep.subr.mxu0 0.0
    %125 = vmatpush1.msra.mxu0 0.0
    %126 = vmatprep.subr.mxu0 0.0
    %127 = vmatpush1.msra.mxu0 0.0
    %128 = vmatprep.mubr.f32.mxu0 0.0
    %129 = vmatmul.mubr.f32.gmra.mrb[0].mxu0 %v47
    %v130 = vpop.f32.mrb[0].mxu0
    %v131 = vadd.f32 0.0, %v130
    %v132 = vpop.f32.mrb[0].mxu0
    %133 = vdwg.mxu0
    %v134 = vadd.f32 %v46, %v131
    %135 = vst [vmem:[#allocation7] sm:$0xff] %v134
    // Predicated region
    $region26: #{tpu_custom_call.1} parent=1 // pred_check
      %p136 = pneg %p41
    $region27: #{tpu_custom_call.1} parent=1 // pred_check_branch
      %138 = sbr.rel (%p136) target = $region29
    $region28: #{tpu_custom_call.1} parent=1 // pred_region
      %v139 = vld [vmem:[#allocation7] sm:$0xff]
      %v140 = vld [vmem:[%s2] sm:$0x1]
      %v142 = vlaneseq
      %v143 = vshrl.u32 %v142, 7
      %v144 = vsub.s32 0, %v143
      %v145 = vrot.slane %v140, %v144
      %v147 = vadd.f32 %v139, %v145
      %v148 = vmax.f32 %v147, 0.0
      %149 = vst [vmem:[#allocation7] sm:$0xff] %v148
    $region29: #{tpu_custom_call.1} parent=1 // pred_fallthru
      _
    // Predicated region
    $region30: #{tpu_custom_call.1} parent=1 // pred_check
      _
    $region31: #{tpu_custom_call.1} parent=1 // pred_check_branch
      %151 = sbr.rel (0) target = $region33
    $region32: #{tpu_custom_call.1} parent=1 // pred_region
      %s153 = ssub.s32 128, 128
      %154 = vsyncadd [#allocation4], %s153
      %s156 = sshll.u32 [#allocation7], 4
      %s157 = int_to_ptr.vmem [resolvable:$true] %s156
      %159 = dma.vmem_to_hbm [thread:$0]  %s157, 128, %s3, [#allocation4]
    $region33: #{tpu_custom_call.1} parent=1 // pred_fallthru
      _
    // Predicated region
    $region34: #{tpu_custom_call.1} parent=1 // pred_check
      _
    $region35: #{tpu_custom_call.1} parent=1 // pred_check_branch
      %161 = sbr.rel (0) target = $region37
    $region36: #{tpu_custom_call.1} parent=1 // pred_region
      %162 = dma.done [#allocation4], 128
    $region37: #{tpu_custom_call.1} parent=1 // pred_fallthru
      _
    %163 = vsyncpa [#allocation3], 1
    %164 = vsyncpa [#allocation6], 1
    %165 = vsyncpa [#allocation4], 1

</llo_original>
